<compile_context>
chip_gen: v7x
topology: tpu7x:2x2x1
jax: 0.10.0
libtpu: 0.0.40
codegen_flags: <defaults>
</compile_context>

<pallas_src>
import functools

import jax
import jax.numpy as jnp
from jax.experimental import pallas as pl
from jax.experimental.pallas import tpu as pltpu

_MIB = 1024 * 1024
_TARGET_BLOCK_BYTES = 4 * _MIB  # per-buffer DMA sweet spot (~1-4 MiB)


def _pixelnorm_kernel(x_ref, o_ref, *, inv_c, eps):
    """Block layout (nb, C, T): channels on sublanes, pixels on lanes."""
    x = x_ref[...]
    xf = x.astype(jnp.float32)                            # f32 accumulation
    sum_sq = jnp.sum(xf * xf, axis=1, keepdims=True)      # (nb, 1, T) f32
    inv = jax.lax.rsqrt(sum_sq * inv_c + eps)             # rsqrt -> EUP slot
    # Multiply in the input dtype: for bf16 this avoids a second full-block
    # f32 intermediate and halves store-side traffic; for f32 it is identical.
    o_ref[...] = (x * inv.astype(x.dtype)).astype(o_ref.dtype)


def _round_down_128(v):
    return max(128, (v // 128) * 128)


def _round_up_128(v):
    return ((v + 127) // 128) * 128


def _vmem_budgets():
    """Return (working-set budget, vmem_limit_bytes), generation-aware."""
    try:
        cap = pltpu.get_tpu_info().vmem_capacity_bytes
    except Exception:
        cap = 64 * _MIB                      # unknown -> assume v7x-sized VMEM
    if cap >= 100 * _MIB:                    # v5e / v6e: 128 MiB per core
        return 40 * _MIB, 96 * _MIB
    return 24 * _MIB, 52 * _MIB              # v7x: 64 MiB per core


def _working_set_bytes(nb, c, tile, dsize):
    """Double-buffered in+out blocks (input dtype) + ~1 full-block f32 temp."""
    blk = nb * c * tile
    return 4 * blk * dsize + 2 * blk * 4


def _select_blocking(n, c, hw, dsize, budget_bytes, target_bytes):
    """Pick (nb, tile) for blocks of shape (nb, C, tile)."""
    slab = c * hw * dsize                    # one item's (C, HW) slab bytes
    total = n * slab

    if slab >= target_bytes or n == 1:
        # Spatial-tiled path: one item per block, tile the lane (pixel) axis.
        nb = 1
        per_lane = 4 * c * dsize + 2 * c * 4
        max_tile = _round_down_128(budget_bytes // max(1, per_lane))
        tile = hw if hw <= max_tile else max_tile
        # v7x megacore: avoid a single-step grid when there is real work.
        if n == 1 and tile >= hw and slab >= 2 * _MIB:
            tile = _round_up_128(pl.cdiv(hw, 2))
        return nb, tile

    # Batch-blocked path: per-item slab is small -> pack several batch items
    # into one block (lane dim = full HW, no wrapper transpose needed).
    per_item_ws = _working_set_bytes(1, c, hw, dsize)
    nb = max(1, min(n,
                    target_bytes // max(1, slab),
                    budget_bytes // max(1, per_item_ws)))
    # v7x megacore: keep >= 2 grid steps when there is enough work.
    if total >= 2 * _MIB and pl.cdiv(n, nb) < 2:
        nb = max(1, pl.cdiv(n, 2))
    return nb, hw


def pixel_norm(x, epsilon=1e-8):
    """x: (N, C, H, W). Returns x / sqrt(mean(x**2, axis=1, keepdims=True) + eps)."""
    N, C, H, W = x.shape
    HW = H * W
    dsize = jnp.dtype(x.dtype).itemsize
    budget, vmem_limit = _vmem_budgets()
    nb, tile = _select_blocking(N, C, HW, dsize, budget, _TARGET_BLOCK_BYTES)

    x2 = x.reshape(N, C, HW)
    grid = (pl.cdiv(N, nb), pl.cdiv(HW, tile))
    kernel = functools.partial(_pixelnorm_kernel, inv_c=1.0 / C, eps=float(epsilon))

    cost = pl.CostEstimate(
        flops=3 * N * C * HW,
        transcendentals=N * HW,
        bytes_accessed=2 * N * C * HW * dsize,
    )

    out = pl.pallas_call(
        kernel,
        out_shape=jax.ShapeDtypeStruct((N, C, HW), x.dtype),
        grid_spec=pltpu.PrefetchScalarGridSpec(
            num_scalar_prefetch=0,
            grid=grid,
            in_specs=[pl.BlockSpec((nb, C, tile), lambda b, s: (b, 0, s))],
            out_specs=pl.BlockSpec((nb, C, tile), lambda b, s: (b, 0, s)),
        ),
        compiler_params=pltpu.CompilerParams(
            dimension_semantics=("parallel", "parallel"),
            vmem_limit_bytes=vmem_limit,
        ),
        cost_estimate=cost,
    )(x2)
    return out.reshape(N, C, H, W)


def _ref(x, eps=1e-8):
    xf = x.astype(jnp.float32)
    return xf / jnp.sqrt(jnp.mean(xf * xf, axis=1, keepdims=True) + eps)


if __name__ == "__main__":
    key = jax.random.PRNGKey(0)
    k1, k2, k3, k4 = jax.random.split(key, 4)

    # Main case (batch-blocked path, lane-dense stores): (2, 4, 16, 16) f32.
    x = jax.random.normal(k1, (2, 4, 16, 16), dtype=jnp.float32)
    y = jax.block_until_ready(pixel_norm(x, epsilon=1e-8))
    assert y.shape == x.shape and y.dtype == x.dtype
    assert jnp.allclose(y, _ref(x), atol=1e-5, rtol=1e-5), "mismatch (batch-blocked path)"

    # Early-PGGAN low-res case (HW < 128, masked lanes): (2, 8, 4, 4) f32.
    xs = jax.random.normal(k2, (2, 8, 4, 4), dtype=jnp.float32)
    ys = jax.block_until_ready(pixel_norm(xs, epsilon=1e-8))
    assert ys.shape == xs.shape and ys.dtype == xs.dtype
    assert jnp.allclose(ys, _ref(xs), atol=1e-5, rtol=1e-5), "mismatch (low-res path)"

    # N == 1 case (spatial-tiled path, tile == HW): (1, 4, 32, 32) f32.
    xn = jax.random.normal(k3, (1, 4, 32, 32), dtype=jnp.float32)
    yn = jax.block_until_ready(pixel_norm(xn, epsilon=1e-8))
    assert jnp.allclose(yn, _ref(xn), atol=1e-5, rtol=1e-5), "mismatch (spatial path)"

    # bf16 case (f32 accumulation, bf16 final multiply/store).
    xb = jax.random.normal(k4, (2, 4, 16, 16), dtype=jnp.bfloat16)
    yb = jax.block_until_ready(pixel_norm(xb, epsilon=1e-8))
    assert yb.dtype == jnp.bfloat16
    assert jnp.allclose(yb.astype(jnp.float32), _ref(xb), atol=5e-2, rtol=5e-2), \
        "mismatch (bf16 path)"

    print("KERNEL_OK")
</pallas_src>

<mosaic_0001>
module attributes {stable_mosaic.version = 11 : i64} {
  func.func @_pixelnorm_kernel(%arg0: i32, %arg1: i32, %arg2: memref<2x4x256xf32, #tpu.memory_space<vmem>>, %arg3: memref<2x4x256xf32, #tpu.memory_space<vmem>>) attributes {dimension_semantics = [#tpu.dimension_semantics<parallel>, #tpu.dimension_semantics<parallel>], iteration_bounds = array<i64: 1, 1>, scalar_prefetch = 0 : i64, scratch_operands = 0 : i64, tpu.core_type = #tpu.core_type<tc>, window_params = [{transform_indices = @transform_0, window_bounds = array<i64: 2, 4, 256>}, {transform_indices = @transform_1, window_bounds = array<i64: 2, 4, 256>}]} {
    %c0 = arith.constant 0 : index
    %c0_0 = arith.constant 0 : index
    %c0_1 = arith.constant 0 : index
    %0 = vector.load %arg2[%c0, %c0_0, %c0_1] : memref<2x4x256xf32, #tpu.memory_space<vmem>>, vector<2x4x256xf32>
    %1 = arith.mulf %0, %0 : vector<2x4x256xf32>
    %cst = arith.constant dense<0.000000e+00> : vector<2x256xf32>
    %2 = vector.multi_reduction <add>, %1, %cst [1] : vector<2x4x256xf32> to vector<2x256xf32>
    %3 = vector.shape_cast %2 : vector<2x256xf32> to vector<2x1x256xf32>
    %cst_2 = arith.constant 2.500000e-01 : f32
    %4 = vector.broadcast %cst_2 : f32 to vector<2x1x256xf32>
    %5 = arith.mulf %3, %4 : vector<2x1x256xf32>
    %cst_3 = arith.constant 9.99999993E-9 : f32
    %6 = vector.broadcast %cst_3 : f32 to vector<2x1x256xf32>
    %7 = arith.addf %5, %6 : vector<2x1x256xf32>
    %8 = math.rsqrt %7 : vector<2x1x256xf32>
    %9 = vector.broadcast %8 : vector<2x1x256xf32> to vector<2x4x256xf32>
    %10 = arith.mulf %0, %9 : vector<2x4x256xf32>
    %c0_4 = arith.constant 0 : index
    %c0_5 = arith.constant 0 : index
    %c0_6 = arith.constant 0 : index
    %11 = vector.load %arg3[%c0_4, %c0_5, %c0_6] : memref<2x4x256xf32, #tpu.memory_space<vmem>>, vector<2x4x256xf32>
    tpu.vector_store %arg3[%c0_4, %c0_5, %c0_6], %10 {strides = array<i32>} : memref<2x4x256xf32, #tpu.memory_space<vmem>>, vector<2x4x256xf32>,
    return
  }
  func.func @transform_0(%arg0: i32, %arg1: i32) -> (i32, i32, i32) {
    %c0_i32 = arith.constant 0 : i32
    %c0_i32_0 = arith.constant 0 : i32
    return %arg0, %c0_i32, %arg1 : i32, i32, i32
  }
  func.func @transform_1(%arg0: i32, %arg1: i32) -> (i32, i32, i32) {
    %c0_i32 = arith.constant 0 : i32
    %c0_i32_0 = arith.constant 0 : i32
    return %arg0, %c0_i32, %arg1 : i32, i32, i32
  }
}

</mosaic_0001>

<llo_original>
// kernel: tpu_custom_call.1
$region0: #{tpu_custom_call.1}
  #allocation0 [shape = 'u32[]', space=smem, size = 0x4, offset = 0x4, fixed_abs, tag = 'smem constant byte address 0x4 - core index']
  #allocation1 [shape = 'u32[144,128]{1,0:T(1,128)}', space=vmem, size = 0x12000, scoped, tag = 'internal scratch']
  %s0 = inlined_call_operand.hbm [shape: f32[2,4,256], index: 0, kind: input, shape index: {}]
  %s1 = inlined_call_operand.hbm [shape: f32[2,4,256], index: 1, kind: output, shape index: {}]
  %s2 = sld [smem:[#allocation0]]
  $region18: #{tpu_custom_call.1} parent=0
    _
  %s4 = ssub.s32 1, %s2
  %s5 = scalar_select 0, %s4, %s2
  $region1: #{tpu_custom_call.1} parent=0
    #allocation2 [shape = 'u8[8192]{0}', space=vmem, size = 0x2000, scoped, tag = 'input window, operand 0, single buffered']
    #allocation3 [shape = 's32[1]{0}', space=sflag, size = 0x4, scoped, tag = 'scoped memory for tpu_custom_call.1']
    #allocation4 [shape = 's32[1]{0}', space=sflag, size = 0x4, scoped, tag = 'scoped memory for tpu_custom_call.1']
    #allocation5 [shape = 'u8[8192]{0}', space=vmem, size = 0x2000, scoped, tag = 'output window, operand 0, single buffered']
    %6 = vsyncpa [#allocation3], 0
    %7 = vsyncpa [#allocation4], 0
    // Predicated region
    $region2: #{tpu_custom_call.1} parent=1 // pred_check
      _
    $region3: #{tpu_custom_call.1} parent=1 // pred_check_branch
      %9 = sbr.rel (0) target = $region5
    $region4: #{tpu_custom_call.1} parent=1 // pred_region
      %s11 = ssub.s32 256, 256
      %12 = vsyncadd [#allocation3], %s11
      %s13 = sshll.u32 [#allocation2], 4
      %s14 = int_to_ptr.vmem [resolvable:$true] %s13
      %19 = dma.hbm_to_vmem [thread:$0]  %s0, 256, %s14, [#allocation3], 128, 128, 8
    $region5: #{tpu_custom_call.1} parent=1 // pred_fallthru
      _
    // Predicated region
    $region6: #{tpu_custom_call.1} parent=1 // pred_check
      _
    $region7: #{tpu_custom_call.1} parent=1 // pred_check_branch
      %21 = sbr.rel (0) target = $region9
    $region8: #{tpu_custom_call.1} parent=1 // pred_region
      %22 = dma.done [#allocation3], 256
    $region9: #{tpu_custom_call.1} parent=1 // pred_fallthru
      _
    %v23 = vld [vmem:[#allocation2] sm:$0xff]
    %v24 = vld [vmem:[#allocation2 + $0x8] sm:$0xff]
    %v25 = vmul.f32 %v23, %v23
    %v26 = vmul.f32 %v24, %v24
    %v29 = vcombine.high %v25, %v25
    %v30 = vcombine.high %v26, %v26
    %vm33 = vcmask 1043456
    %v34 = vsel %vm33, %v25, 0.0
    %v35 = vrot.slane %v34, 4
    %v36 = vadd.f32 %v34, %v35
    %v37 = vrot.slane %v36, 2
    %v38 = vadd.f32 %v36, %v37
    %v39 = vrot.slane %v38, 1
    %v40 = vadd.f32 %v38, %v39
    %v41 = vsel %vm33, %v29, 0.0
    %v42 = vrot.slane %v41, 4
    %v43 = vadd.f32 %v41, %v42
    %v44 = vrot.slane %v43, 2
    %v45 = vadd.f32 %v43, %v44
    %v46 = vrot.slane %v45, 1
    %v47 = vadd.f32 %v45, %v46
    %v48 = vsel %vm33, %v26, 0.0
    %v49 = vrot.slane %v48, 4
    %v50 = vadd.f32 %v48, %v49
    %v51 = vrot.slane %v50, 2
    %v52 = vadd.f32 %v50, %v51
    %v53 = vrot.slane %v52, 1
    %v54 = vadd.f32 %v52, %v53
    %v55 = vsel %vm33, %v30, 0.0
    %v56 = vrot.slane %v55, 4
    %v57 = vadd.f32 %v55, %v56
    %v58 = vrot.slane %v57, 2
    %v59 = vadd.f32 %v57, %v58
    %v60 = vrot.slane %v59, 1
    %v61 = vadd.f32 %v59, %v60
    %v62 = vmul.f32 %v40, 0.25
    %v63 = vmul.f32 %v47, 0.25
    %v64 = vmul.f32 %v54, 0.25
    %v65 = vmul.f32 %v61, 0.25
    %v66 = vadd.f32 %v62, 1e-08
    %v67 = vadd.f32 %v63, 1e-08
    %v68 = vadd.f32 %v64, 1e-08
    %v69 = vadd.f32 %v65, 1e-08
    %v70 = vrsqrt.pop %v66
    %v71 = vrsqrt.pop %v67
    %v72 = vrsqrt.pop %v68
    %v73 = vrsqrt.pop %v69
    %v78 = vcombine.low %v70, %v71
    %v79 = vcombine.low %v72, %v73
    %v82 = vmul.f32 %v23, %v78
    %v83 = vmul.f32 %v24, %v79
    %84 = vst [vmem:[#allocation5] sm:$0xff] %v82
    %85 = vst [vmem:[#allocation5 + $0x8] sm:$0xff] %v83
    // Predicated region
    $region10: #{tpu_custom_call.1} parent=1 // pred_check
      _
    $region11: #{tpu_custom_call.1} parent=1 // pred_check_branch
      %87 = sbr.rel (0) target = $region13
    $region12: #{tpu_custom_call.1} parent=1 // pred_region
      %s89 = ssub.s32 256, 256
      %90 = vsyncadd [#allocation4], %s89
      %s91 = sshll.u32 [#allocation5], 4
      %s92 = int_to_ptr.vmem [resolvable:$true] %s91
      %97 = dma.vmem_to_hbm [thread:$0]  %s92, 256, %s1, [#allocation4], 128, 128, 8
    $region13: #{tpu_custom_call.1} parent=1 // pred_fallthru
      _
    // Predicated region
    $region14: #{tpu_custom_call.1} parent=1 // pred_check
      _
    $region15: #{tpu_custom_call.1} parent=1 // pred_check_branch
      %99 = sbr.rel (0) target = $region17
    $region16: #{tpu_custom_call.1} parent=1 // pred_region
      %100 = dma.done [#allocation4], 256
    $region17: #{tpu_custom_call.1} parent=1 // pred_fallthru
      _
    %101 = vsyncpa [#allocation3], 1
    %102 = vsyncpa [#allocation4], 1

</llo_original>
